<compile_context>
chip_gen: v6e
topology: v6e:2x2x1
jax: 0.10.0
libtpu: 0.0.40
codegen_flags: <defaults>
</compile_context>

<pallas_src>
import jax
import jax.numpy as jnp
from jax.experimental import pallas as pl
from jax.experimental.pallas import tpu as pltpu


DIM_DESC = 128  # descriptor dimension (lane-aligned)


def _basemodel2d_kernel(x_ref, wdesc_t_ref, bdesc_ref, wdet_ref, bdet_ref,
                        det_ref, desc_ref):
    # x_ref:       (3, TM)        channel-planar pixel tile (lane-dense DMA)
    # wdesc_t_ref: (DIM_DESC, 3)  descriptor weight, transposed to (M, K) for the MXU
    # bdesc_ref:   (DIM_DESC, 1)  descriptor bias as a column
    # wdet_ref:    (3,)  SMEM     detection weights (scalars)
    # bdet_ref:    (1,)  SMEM     detection bias (scalar)
    # det_ref:     (1, TM)        lane-dense detection scores in [0, 1]
    # desc_ref:    (TM, DIM_DESC) L2-normalized descriptors (bf16 by default)
    x = x_ref[...].astype(jnp.float32)                       # (3, TM)

    # --- detection head: 3 scalar FMAs on the lane-dense channel rows (pure VPU,
    #     full f32, no MXU / no relayout), written as a dense (1, TM) slab. ---
    logit = (wdet_ref[0] * x[0:1, :]
             + wdet_ref[1] * x[1:2, :]
             + wdet_ref[2] * x[2:3, :]
             + bdet_ref[0])                                  # (1, TM)
    det_ref[...] = jax.nn.sigmoid(logit).astype(det_ref.dtype)

    # --- descriptor head: K=3 contraction on the otherwise-idle MXU.
    #     Canonical (M,K)@(K,N): (DIM_DESC,3)@(3,TM) -> (DIM_DESC,TM); bf16 operands,
    #     f32 accumulation.  Bias add / square / sublane reduce / rsqrt / scale run
    #     on VPU+XLU+EUP; a single aligned f32 transpose restores the (TM, DIM_DESC)
    #     output orientation for a lane-dense bf16 store. ---
    t = jnp.dot(wdesc_t_ref[...].astype(jnp.bfloat16),
                x.astype(jnp.bfloat16),
                preferred_element_type=jnp.float32)          # (DIM_DESC, TM)
    t = t + bdesc_ref[...]                                   # (+bias, lane broadcast)
    inv_norm = jax.lax.rsqrt(jnp.sum(t * t, axis=0, keepdims=True) + 1e-12)  # (1, TM)
    desc_ref[...] = jnp.transpose(t * inv_norm).astype(desc_ref.dtype)


def _vmem_limit_bytes():
    # ~3/4 of physical VMEM: v5e/v6e (128 MiB) -> 96 MiB, v7x (64 MiB) -> 48 MiB.
    try:
        cap = int(getattr(pltpu.get_tpu_info(), "vmem_capacity_bytes",
                          64 * 1024 * 1024))
    except Exception:
        cap = 64 * 1024 * 1024
    return min(96 * 1024 * 1024, (cap * 3) // 4)


def basemodel2d_forward(x, w_desc, b_desc, w_det, b_det, *, tm=8192,
                        desc_dtype=jnp.bfloat16, det_dtype=jnp.float32):
    """x: (b, h, w, 3) float32.  Returns (det_score (b,h,w), desc (b,h,w,DIM_DESC)).

    desc_dtype defaults to bf16 (the dominant HBM write); pass jnp.float32 if exact
    f32 descriptors are required downstream.
    """
    b, h, w, c = x.shape
    assert c == 3
    n = b * h * w

    # Channel-planar presentation: one cheap 12 B/px wrapper transpose makes the
    # per-step x DMA a dense, contiguous (3, tm) slab (pixels on lanes) instead of
    # thousands of 12-byte strided writes into a 128-lane-padded (tm, 3) tile.
    x_planar = jnp.transpose(x.reshape(n, 3).astype(jnp.float32))     # (3, n)

    w_desc_t = jnp.transpose(w_desc.astype(jnp.float32))              # (DIM_DESC, 3)
    b_desc_col = b_desc.astype(jnp.float32).reshape(DIM_DESC, 1)
    w_det_vec = w_det.astype(jnp.float32).reshape(3)
    b_det_vec = b_det.astype(jnp.float32).reshape(1)

    # Large row tile (the kernel is HBM-write bound -> amortize the ~0.35us/step grid
    # overhead); multiple of 512 keeps every block (8,128)-aligned; clamp to the
    # problem size so tiny inputs don't over-allocate VMEM.
    assert tm % 512 == 0 and tm > 0
    tm = max(512, min(tm, pl.cdiv(n, 512) * 512))
    grid = (pl.cdiv(n, tm),)

    desc_bytes = jnp.dtype(desc_dtype).itemsize
    det_bytes = jnp.dtype(det_dtype).itemsize
    cost = pl.CostEstimate(
        flops=n * (9 * DIM_DESC + 12),
        transcendentals=2 * n,
        bytes_accessed=n * (3 * 4 + DIM_DESC * desc_bytes + det_bytes),
    )

    det2d, desc_flat = pl.pallas_call(
        _basemodel2d_kernel,
        out_shape=(
            jax.ShapeDtypeStruct((1, n), det_dtype),
            jax.ShapeDtypeStruct((n, DIM_DESC), desc_dtype),
        ),
        grid_spec=pltpu.PrefetchScalarGridSpec(
            num_scalar_prefetch=0,
            grid=grid,
            in_specs=[
                pl.BlockSpec((3, tm), lambda i: (0, i)),              # x (channel-planar)
                pl.BlockSpec((DIM_DESC, 3), lambda i: (0, 0)),        # w_desc^T (replicated)
                pl.BlockSpec((DIM_DESC, 1), lambda i: (0, 0)),        # b_desc column
                pl.BlockSpec(memory_space=pltpu.MemorySpace.SMEM),    # w_det scalars
                pl.BlockSpec(memory_space=pltpu.MemorySpace.SMEM),    # b_det scalar
            ],
            out_specs=[
                pl.BlockSpec((1, tm), lambda i: (0, i)),              # det (lane-dense)
                pl.BlockSpec((tm, DIM_DESC), lambda i: (i, 0)),       # desc
            ],
        ),
        compiler_params=pltpu.CompilerParams(
            # Single parallel axis -> megacore-shardable on v7x's 2 TensorCores;
            # v5e/v6e have a single TC so this is a no-op there.
            dimension_semantics=("parallel",),
            vmem_limit_bytes=_vmem_limit_bytes(),
        ),
        cost_estimate=cost,
    )(x_planar, w_desc_t, b_desc_col, w_det_vec, b_det_vec)

    det_score = det2d.reshape(b, h, w)            # free reshape (row-major)
    desc = desc_flat.reshape(b, h, w, DIM_DESC)   # free reshape (row-major)
    return det_score, desc


def init_params(key):
    k1, k2, k3, k4 = jax.random.split(key, 4)
    w_desc = jax.random.normal(k1, (3, DIM_DESC), jnp.float32) * 0.1
    b_desc = jax.random.normal(k2, (1, DIM_DESC), jnp.float32) * 0.01
    w_det = jax.random.normal(k3, (1, 3), jnp.float32) * 0.1
    b_det = jax.random.normal(k4, (1, 1), jnp.float32) * 0.01
    return w_desc, b_desc, w_det, b_det


def _reference_forward(x, w_desc, b_desc, w_det, b_det):
    """Pure-JAX reference (no Pallas, full f32)."""
    b, h, w, _ = x.shape
    xf = x.reshape(-1, 3).astype(jnp.float32)
    desc = (xf[:, 0:1] * w_desc[0:1, :]
            + xf[:, 1:2] * w_desc[1:2, :]
            + xf[:, 2:3] * w_desc[2:3, :]
            + b_desc)
    desc = desc * jax.lax.rsqrt(jnp.sum(desc * desc, axis=-1, keepdims=True) + 1e-12)
    logit = (xf[:, 0] * w_det[0, 0] + xf[:, 1] * w_det[0, 1]
             + xf[:, 2] * w_det[0, 2] + b_det[0, 0])
    det = jax.nn.sigmoid(logit)
    return det.reshape(b, h, w), desc.reshape(b, h, w, DIM_DESC)


if __name__ == "__main__":
    key = jax.random.PRNGKey(0)
    kx, kp = jax.random.split(key)

    # Small shape consistent with the module's forward signature: (b, h, w, 3).
    b, h, w = 2, 16, 16
    x = jax.random.uniform(kx, (b, h, w, 3), jnp.float32)

    w_desc, b_desc, w_det, b_det = init_params(kp)

    det_score, desc = basemodel2d_forward(x, w_desc, b_desc, w_det, b_det)
    det_score, desc = jax.block_until_ready((det_score, desc))

    assert det_score.shape == (b, h, w)
    assert desc.shape == (b, h, w, DIM_DESC)
    assert bool(jnp.all((det_score >= 0.0) & (det_score <= 1.0)))

    # Numerical check against the pure-JAX f32 reference.
    #  - det runs fully in f32 on the VPU -> tight tolerance.
    #  - desc contraction uses bf16 MXU operands and a bf16 output -> loose tolerance.
    det_ref, desc_ref = _reference_forward(x, w_desc, b_desc, w_det, b_det)
    desc_f32 = desc.astype(jnp.float32)
    assert bool(jnp.allclose(det_score, det_ref, atol=1e-4, rtol=0.0))
    assert bool(jnp.allclose(desc_f32, desc_ref, atol=1e-2, rtol=0.0))
    assert bool(jnp.allclose(jnp.linalg.norm(desc_f32, axis=-1), 1.0, atol=2e-2))

    print("KERNEL_OK")
</pallas_src>

<mosaic_0001>
module attributes {stable_mosaic.version = 11 : i64} {
  func.func @_basemodel2d_kernel(%arg0: i32, %arg1: memref<3x512xf32, #tpu.memory_space<vmem>>, %arg2: memref<128x3xf32, #tpu.memory_space<vmem>>, %arg3: memref<128x1xf32, #tpu.memory_space<vmem>>, %arg4: memref<3xf32, #tpu.memory_space<smem>>, %arg5: memref<1xf32, #tpu.memory_space<smem>>, %arg6: memref<1x512xf32, #tpu.memory_space<vmem>>, %arg7: memref<512x128xbf16, #tpu.memory_space<vmem>>) attributes {dimension_semantics = [#tpu.dimension_semantics<parallel>], iteration_bounds = array<i64: 1>, scalar_prefetch = 0 : i64, scratch_operands = 0 : i64, tpu.core_type = #tpu.core_type<tc>, window_params = [{transform_indices = @transform_0, window_bounds = array<i64: 3, 512>}, {pipeline_mode = #tpu.pipeline_mode<synchronous>, transform_indices = @transform_1, window_bounds = array<i64: 128, 3>}, {pipeline_mode = #tpu.pipeline_mode<synchronous>, transform_indices = @transform_2, window_bounds = array<i64: 128, 1>}, {transform_indices = @transform_3, window_bounds = array<i64: 3>}, {transform_indices = @transform_4, window_bounds = array<i64: 1>}, {transform_indices = @transform_5, window_bounds = array<i64: 1, 512>}, {transform_indices = @transform_6, window_bounds = array<i64: 512, 128>}]} {
    %c0 = arith.constant 0 : index
    %c0_0 = arith.constant 0 : index
    %0 = vector.load %arg1[%c0, %c0_0] : memref<3x512xf32, #tpu.memory_space<vmem>>, vector<3x512xf32>
    %c0_1 = arith.constant 0 : index
    %1 = memref.load %arg4[%c0_1] : memref<3xf32, #tpu.memory_space<smem>>
    %2 = vector.extract_strided_slice %0 {offsets = [0, 0], sizes = [1, 512], strides = [1, 1]} : vector<3x512xf32> to vector<1x512xf32>
    %3 = vector.broadcast %1 : f32 to vector<1x512xf32>
    %4 = arith.mulf %3, %2 : vector<1x512xf32>
    %c1 = arith.constant 1 : index
    %5 = memref.load %arg4[%c1] : memref<3xf32, #tpu.memory_space<smem>>
    %6 = vector.extract_strided_slice %0 {offsets = [1, 0], sizes = [1, 512], strides = [1, 1]} : vector<3x512xf32> to vector<1x512xf32>
    %7 = vector.broadcast %5 : f32 to vector<1x512xf32>
    %8 = arith.mulf %7, %6 : vector<1x512xf32>
    %9 = arith.addf %4, %8 : vector<1x512xf32>
    %c2 = arith.constant 2 : index
    %10 = memref.load %arg4[%c2] : memref<3xf32, #tpu.memory_space<smem>>
    %11 = vector.extract_strided_slice %0 {offsets = [2, 0], sizes = [1, 512], strides = [1, 1]} : vector<3x512xf32> to vector<1x512xf32>
    %12 = vector.broadcast %10 : f32 to vector<1x512xf32>
    %13 = arith.mulf %12, %11 : vector<1x512xf32>
    %14 = arith.addf %9, %13 : vector<1x512xf32>
    %c0_2 = arith.constant 0 : index
    %15 = memref.load %arg5[%c0_2] : memref<1xf32, #tpu.memory_space<smem>>
    %16 = vector.broadcast %15 : f32 to vector<1x512xf32>
    %17 = arith.addf %14, %16 : vector<1x512xf32>
    %18 = arith.negf %17 : vector<1x512xf32>
    %19 = math.exp %18 : vector<1x512xf32>
    %cst = arith.constant 1.000000e+00 : f32
    %20 = vector.broadcast %cst : f32 to vector<1x512xf32>
    %21 = arith.addf %20, %19 : vector<1x512xf32>
    %22 = arith.divf %20, %21 : vector<1x512xf32>
    %c0_3 = arith.constant 0 : index
    %c0_4 = arith.constant 0 : index
    %23 = vector.load %arg6[%c0_3, %c0_4] : memref<1x512xf32, #tpu.memory_space<vmem>>, vector<1x512xf32>
    tpu.vector_store %arg6[%c0_3, %c0_4], %22 {strides = array<i32>} : memref<1x512xf32, #tpu.memory_space<vmem>>, vector<1x512xf32>,
    %c0_5 = arith.constant 0 : index
    %c0_6 = arith.constant 0 : index
    %24 = vector.load %arg2[%c0_5, %c0_6] : memref<128x3xf32, #tpu.memory_space<vmem>>, vector<128x3xf32>
    %25 = arith.truncf %24 : vector<128x3xf32> to vector<128x3xbf16>
    %26 = arith.truncf %0 : vector<3x512xf32> to vector<3x512xbf16>
    %cst_7 = arith.constant dense<0.000000e+00> : vector<128x512xf32>
    %27 = tpu.matmul %25, %26, %cst_7 {dimension_numbers = #tpu.dot_dimension_numbers<[1], [0], [0], [1], [0, 0, 1, 1], [], []>} : vector<128x3xbf16>, vector<3x512xbf16>, vector<128x512xf32> -> vector<128x512xf32>
    %c0_8 = arith.constant 0 : index
    %c0_9 = arith.constant 0 : index
    %28 = vector.load %arg3[%c0_8, %c0_9] : memref<128x1xf32, #tpu.memory_space<vmem>>, vector<128x1xf32>
    %29 = vector.broadcast %28 : vector<128x1xf32> to vector<128x512xf32>
    %30 = arith.addf %27, %29 : vector<128x512xf32>
    %31 = arith.mulf %30, %30 : vector<128x512xf32>
    %cst_10 = arith.constant dense<0.000000e+00> : vector<512xf32>
    %32 = vector.multi_reduction <add>, %31, %cst_10 [0] : vector<128x512xf32> to vector<512xf32>
    %33 = vector.shape_cast %32 : vector<512xf32> to vector<1x512xf32>
    %cst_11 = arith.constant 9.99999996E-13 : f32
    %34 = vector.broadcast %cst_11 : f32 to vector<1x512xf32>
    %35 = arith.addf %33, %34 : vector<1x512xf32>
    %36 = math.rsqrt %35 : vector<1x512xf32>
    %37 = vector.broadcast %36 : vector<1x512xf32> to vector<128x512xf32>
    %38 = arith.mulf %30, %37 : vector<128x512xf32>
    %39 = tpu.transpose %38, [1, 0] : vector<128x512xf32> -> vector<512x128xf32>
    %40 = arith.truncf %39 : vector<512x128xf32> to vector<512x128xbf16>
    %c0_12 = arith.constant 0 : index
    %c0_13 = arith.constant 0 : index
    %41 = vector.load %arg7[%c0_12, %c0_13] : memref<512x128xbf16, #tpu.memory_space<vmem>>, vector<512x128xbf16>
    tpu.vector_store %arg7[%c0_12, %c0_13], %40 {strides = array<i32>} : memref<512x128xbf16, #tpu.memory_space<vmem>>, vector<512x128xbf16>,
    return
  }
  func.func @transform_0(%arg0: i32) -> (i32, i32) {
    %c0_i32 = arith.constant 0 : i32
    %c0_i32_0 = arith.constant 0 : i32
    return %c0_i32, %arg0 : i32, i32
  }
  func.func @transform_1(%arg0: i32) -> (i32, i32) {
    %c0_i32 = arith.constant 0 : i32
    %c0_i32_0 = arith.constant 0 : i32
    %c0_i32_1 = arith.constant 0 : i32
    return %c0_i32, %c0_i32_0 : i32, i32
  }
  func.func @transform_2(%arg0: i32) -> (i32, i32) {
    %c0_i32 = arith.constant 0 : i32
    %c0_i32_0 = arith.constant 0 : i32
    %c0_i32_1 = arith.constant 0 : i32
    return %c0_i32, %c0_i32_0 : i32, i32
  }
  func.func @transform_3(%arg0: i32) -> i32 {
    %c0_i32 = arith.constant 0 : i32
    %c0_i32_0 = arith.constant 0 : i32
    return %c0_i32 : i32
  }
  func.func @transform_4(%arg0: i32) -> i32 {
    %c0_i32 = arith.constant 0 : i32
    %c0_i32_0 = arith.constant 0 : i32
    return %c0_i32 : i32
  }
  func.func @transform_5(%arg0: i32) -> (i32, i32) {
    %c0_i32 = arith.constant 0 : i32
    %c0_i32_0 = arith.constant 0 : i32
    return %c0_i32, %arg0 : i32, i32
  }
  func.func @transform_6(%arg0: i32) -> (i32, i32) {
    %c0_i32 = arith.constant 0 : i32
    %c0_i32_0 = arith.constant 0 : i32
    return %arg0, %c0_i32 : i32, i32
  }
}

</mosaic_0001>

<llo_original>
// kernel: tpu_custom_call.1
$region0: #{tpu_custom_call.1}
  #allocation0 [shape = 'u32[]', space=smem, size = 0x4, offset = 0x4, fixed_abs, tag = 'smem constant byte address 0x4 - core index']
  #allocation1 [shape = 'u32[144,128]{1,0:T(1,128)}', space=vmem, size = 0x12000, scoped, tag = 'internal scratch']
  #allocation2 [shape = 'f32[1]{0:T(128)S(6)}', space=smem, size = 0x200, scoped, tag = 'scoped memory for tpu_custom_call.1']
  %s0 = inlined_call_operand.vmem [shape: f32[3,512], index: 0, kind: input, shape index: {}]
  %s1 = inlined_call_operand.vmem [shape: f32[128,3], index: 1, kind: input, shape index: {}]
  %s2 = inlined_call_operand.vmem [shape: f32[128,1], index: 2, kind: input, shape index: {}]
  %s3 = inlined_call_operand.vmem [shape: f32[3], index: 3, kind: input, shape index: {}]
  %s4 = inlined_call_operand.<no memory space> [shape: f32[1], index: 4, kind: input, shape index: {}]
  %s5 = inlined_call_operand.hbm [shape: f32[1,512], index: 5, kind: output, shape index: {0}]
  %s6 = inlined_call_operand.hbm [shape: bf16[512,128], index: 6, kind: output, shape index: {1}]
  %7 = xla_tuple %s5, %s6
  %s8 = sld [smem:[#allocation0]]
  $region42: #{tpu_custom_call.1} parent=0
    _
  %s10 = ssub.s32 1, %s8
  %s11 = scalar_select 0, %s10, %s8
  %12 = sst [smem:[#allocation2]] %s4
  $region1: #{tpu_custom_call.1} parent=0
    #allocation3 [shape = 'u8[512]{0}', space=smem, size = 0x200, scoped, tag = 'input window, operand 3, single buffered']
    #allocation4 [shape = 's32[1]{0}', space=sflag, size = 0x4, scoped, tag = 'scoped memory for tpu_custom_call.1']
    #allocation5 [shape = 's32[1]{0}', space=sflag, size = 0x4, scoped, tag = 'scoped memory for tpu_custom_call.1']
    #allocation6 [shape = 'u8[2048]{0}', space=vmem, size = 0x800, scoped, tag = 'output window, operand 0, single buffered']
    #allocation7 [shape = 'u8[131072]{0}', space=vmem, size = 0x20000, scoped, tag = 'output window, operand 1, single buffered']
    #allocation8 [shape = 's32[1]{0}', space=sflag, size = 0x4, scoped, tag = 'scoped memory for tpu_custom_call.1']
    %13 = vsyncpa [#allocation5], 0
    %14 = vsyncpa [#allocation4], 0
    %15 = vsyncpa [#allocation8], 0
    // Predicated region
    $region2: #{tpu_custom_call.1} parent=1 // pred_check
      _
    $region3: #{tpu_custom_call.1} parent=1 // pred_check_branch
      %17 = sbr.rel (0) target = $region5
    $region4: #{tpu_custom_call.1} parent=1 // pred_region
      _
    $region5: #{tpu_custom_call.1} parent=1 // pred_fallthru
      _
    // Predicated region
    $region6: #{tpu_custom_call.1} parent=1 // pred_check
      _
    $region7: #{tpu_custom_call.1} parent=1 // pred_check_branch
      %19 = sbr.rel (0) target = $region9
    $region8: #{tpu_custom_call.1} parent=1 // pred_region
      _
    $region9: #{tpu_custom_call.1} parent=1 // pred_fallthru
      _
    // Predicated region
    $region10: #{tpu_custom_call.1} parent=1 // pred_check
      _
    $region11: #{tpu_custom_call.1} parent=1 // pred_check_branch
      %21 = sbr.rel (0) target = $region13
    $region12: #{tpu_custom_call.1} parent=1 // pred_region
      _
    $region13: #{tpu_custom_call.1} parent=1 // pred_fallthru
      _
    // Predicated region
    $region14: #{tpu_custom_call.1} parent=1 // pred_check
      _
    $region15: #{tpu_custom_call.1} parent=1 // pred_check_branch
      %23 = sbr.rel (0) target = $region17
    $region16: #{tpu_custom_call.1} parent=1 // pred_region
      %s25 = ssub.s32 16, 16
      %26 = vsyncadd [#allocation5], %s25
      %s28 = sshll.u32 %s3, 4
      %s29 = int_to_ptr.vmem [resolvable:$true] %s28
      %31 = dma.vmem_to_smem %s29, 16, [#allocation3], [#allocation5]
    $region17: #{tpu_custom_call.1} parent=1 // pred_fallthru
      _
    // Predicated region
    $region18: #{tpu_custom_call.1} parent=1 // pred_check
      _
    $region19: #{tpu_custom_call.1} parent=1 // pred_check_branch
      %33 = sbr.rel (0) target = $region21
    $region20: #{tpu_custom_call.1} parent=1 // pred_region
      _
    $region21: #{tpu_custom_call.1} parent=1 // pred_fallthru
      _
    // Predicated region
    $region22: #{tpu_custom_call.1} parent=1 // pred_check
      _
    $region23: #{tpu_custom_call.1} parent=1 // pred_check_branch
      %35 = sbr.rel (0) target = $region25
    $region24: #{tpu_custom_call.1} parent=1 // pred_region
      %36 = dma.done [#allocation5], 16
    $region25: #{tpu_custom_call.1} parent=1 // pred_fallthru
      _
    %37 = sfence
    %v39 = vld [vmem:[%s0] sm:$0x77]
    %v40 = vld [vmem:[%s0 + $0x8] sm:$0x77]
    %s41 = sld [smem:[#allocation3]]
    %v42 = vstv %s41
    %v43 = vmul.f32 %v42, %v39
    %v44 = vmul.f32 %v42, %v40
    %s45 = sld [smem:[#allocation3 + $0x1]]
    %v46 = vstv %s45
    %v47 = vmul.f32 %v46, %v39
    %v48 = vmul.f32 %v46, %v40
    %v51 = vrot.slane %v47, 5
    %v52 = vrot.slane %v51, 4
    %v53 = vrot.slane %v48, 5
    %v54 = vrot.slane %v53, 4
    %v57 = vadd.f32 %v43, %v52
    %v58 = vadd.f32 %v44, %v54
    %s59 = sld [smem:[#allocation3 + $0x2]]
    %v60 = vstv %s59
    %v61 = vmul.f32 %v60, %v39
    %v62 = vmul.f32 %v60, %v40
    %v65 = vrot.slane %v61, 6
    %v66 = vrot.slane %v65, 4
    %v67 = vrot.slane %v62, 6
    %v68 = vrot.slane %v67, 4
    %v71 = vadd.f32 %v57, %v66
    %v72 = vadd.f32 %v58, %v68
    %s73 = sld [smem:[#allocation2]]
    %v74 = vstv %s73
    %v75 = vadd.f32 %v71, %v74
    %v76 = vadd.f32 %v72, %v74
    %v77 = vxor.u32 %v75, 2147483648
    %v78 = vxor.u32 %v76, 2147483648
    %v79 = vmul.f32 %v77, 1.442695
    %v80 = vpow.pop %v79
    %v81 = vmul.f32 %v78, 1.442695
    %v82 = vpow.pop %v81
    %v83 = vadd.f32 %v80, 1.0
    %v84 = vadd.f32 %v82, 1.0
    %v85 = vrcp.pop %v83
    %v86 = vmul.f32 1.0, %v85
    %v87 = vrcp.pop %v84
    %v88 = vmul.f32 1.0, %v87
    %v92 = vunpack.c.l.s4 1966171168
    %v93 = vunpack.c.0.s8 %v92
    %v94 = vlaneseq
    %v95 = vshrl.u32 %v94, 7
    %v96 = vsub.s32 %v93, %v95
    %v97 = vrot.slane %v86, %v96
    %v99 = vunpack.c.l.s4 1966171168
    %v100 = vunpack.c.0.s8 %v99
    %v101 = vlaneseq
    %v102 = vshrl.u32 %v101, 7
    %v103 = vsub.s32 %v100, %v102
    %v104 = vrot.slane %v88, %v103
    %v105 = vcombine.low %v97, %v104
    %v107 = vunpack.c.l.s4 1966171168
    %v108 = vunpack.c.0.s8 %v107
    %v109 = vlaneseq
    %v110 = vshrl.u32 %v109, 7
    %v111 = vsub.s32 %v108, %v110
    %v112 = vrot.slane %v105, %v111
    %v114 = vlaneseq
    %vm115 = vcmp.ge.s32.totalorder %v114, 0
    %vm116 = vcmp.lt.s32.totalorder %v114, 512
    %vm117 = vmand %vm115, %vm116
    %118 = vst.msk [vmem:[#allocation6] sm:$0xf] %vm117, %v112
    %v119 = vld [vmem:[%s1] sm:$0xff]
    %v120 = vld [vmem:[%s1 + $0x8] sm:$0xff]
    %v121 = vld [vmem:[%s1 + $0x10] sm:$0xff]
    %v122 = vld [vmem:[%s1 + $0x18] sm:$0xff]
    %v123 = vld [vmem:[%s1 + $0x20] sm:$0xff]
    %v124 = vld [vmem:[%s1 + $0x28] sm:$0xff]
    %v125 = vld [vmem:[%s1 + $0x30] sm:$0xff]
    %v126 = vld [vmem:[%s1 + $0x38] sm:$0xff]
    %v127 = vld [vmem:[%s1 + $0x40] sm:$0xff]
    %v128 = vld [vmem:[%s1 + $0x48] sm:$0xff]
    %v129 = vld [vmem:[%s1 + $0x50] sm:$0xff]
    %v130 = vld [vmem:[%s1 + $0x58] sm:$0xff]
    %v131 = vld [vmem:[%s1 + $0x60] sm:$0xff]
    %v132 = vld [vmem:[%s1 + $0x68] sm:$0xff]
    %v133 = vld [vmem:[%s1 + $0x70] sm:$0xff]
    %v134 = vld [vmem:[%s1 + $0x78] sm:$0xff]
    %v135 = vpack.c.bf16 %v120, %v119
    %v136 = vpack.c.bf16 %v122, %v121
    %v137 = vpack.c.bf16 %v124, %v123
    %v138 = vpack.c.bf16 %v126, %v125
    %v139 = vpack.c.bf16 %v128, %v127
    %v140 = vpack.c.bf16 %v130, %v129
    %v141 = vpack.c.bf16 %v132, %v131
    %v142 = vpack.c.bf16 %v134, %v133
    %v145 = vcombine.high %v39, %v39
    %v146 = vcombine.high %v40, %v40
    %v149 = vpack.c.bf16 %v39, %v39
    %v150 = vpack.c.bf16 %v145, %v145
    %v151 = vpack.c.bf16 %v40, %v40
    %v152 = vpack.c.bf16 %v146, %v146
    %v153 = vld [vmem:[%s2] sm:$0xff]
    %v154 = vld [vmem:[%s2 + $0x8] sm:$0xff]
    %v155 = vld [vmem:[%s2 + $0x10] sm:$0xff]
    %v156 = vld [vmem:[%s2 + $0x18] sm:$0xff]
    %v157 = vld [vmem:[%s2 + $0x20] sm:$0xff]
    %v158 = vld [vmem:[%s2 + $0x28] sm:$0xff]
    %v159 = vld [vmem:[%s2 + $0x30] sm:$0xff]
    %v160 = vld [vmem:[%s2 + $0x38] sm:$0xff]
    %v161 = vld [vmem:[%s2 + $0x40] sm:$0xff]
    %v162 = vld [vmem:[%s2 + $0x48] sm:$0xff]
    %v163 = vld [vmem:[%s2 + $0x50] sm:$0xff]
    %v164 = vld [vmem:[%s2 + $0x58] sm:$0xff]
    %v165 = vld [vmem:[%s2 + $0x60] sm:$0xff]
    %v166 = vld [vmem:[%s2 + $0x68] sm:$0xff]
    %v167 = vld [vmem:[%s2 + $0x70] sm:$0xff]
    %v168 = vld [vmem:[%s2 + $0x78] sm:$0xff]
    %170 = vset.pattern.permute.xlu0 0
    %171 = vperm.xlu0 %170, %v153
    %v172 = vpop.permute.xlu0 %171
    %175 = vset.pattern.permute.xlu0 0
    %176 = vperm.xlu0 %175, %v154
    %v177 = vpop.permute.xlu0 %176
    %180 = vset.pattern.permute.xlu0 0
    %181 = vperm.xlu0 %180, %v155
    %v182 = vpop.permute.xlu0 %181
    %185 = vset.pattern.permute.xlu0 0
    %186 = vperm.xlu0 %185, %v156
    %v187 = vpop.permute.xlu0 %186
    %190 = vset.pattern.permute.xlu0 0
    %191 = vperm.xlu0 %190, %v157
    %v192 = vpop.permute.xlu0 %191
    %195 = vset.pattern.permute.xlu0 0
    %196 = vperm.xlu0 %195, %v158
    %v197 = vpop.permute.xlu0 %196
    %200 = vset.pattern.permute.xlu0 0
    %201 = vperm.xlu0 %200, %v159
    %v202 = vpop.permute.xlu0 %201
    %205 = vset.pattern.permute.xlu0 0
    %206 = vperm.xlu0 %205, %v160
    %v207 = vpop.permute.xlu0 %206
    %210 = vset.pattern.permute.xlu0 0
    %211 = vperm.xlu0 %210, %v161
    %v212 = vpop.permute.xlu0 %211
    %215 = vset.pattern.permute.xlu0 0
    %216 = vperm.xlu0 %215, %v162
    %v217 = vpop.permute.xlu0 %216
    %220 = vset.pattern.permute.xlu0 0
    %221 = vperm.xlu0 %220, %v163
    %v222 = vpop.permute.xlu0 %221
    %225 = vset.pattern.permute.xlu0 0
    %226 = vperm.xlu0 %225, %v164
    %v227 = vpop.permute.xlu0 %226
    %230 = vset.pattern.permute.xlu0 0
    %231 = vperm.xlu0 %230, %v165
    %v232 = vpop.permute.xlu0 %231
    %235 = vset.pattern.permute.xlu0 0
    %236 = vperm.xlu0 %235, %v166
    %v237 = vpop.permute.xlu0 %236
    %240 = vset.pattern.permute.xlu0 0
    %241 = vperm.xlu0 %240, %v167
    %v242 = vpop.permute.xlu0 %241
    %245 = vset.pattern.permute.xlu0 0
    %246 = vperm.xlu0 %245, %v168
    %v247 = vpop.permute.xlu0 %246
    %vm249 = vcmask 23552
    %v251 = vsel %vm249, %v135, 0
    %v254 = vsel %vm249, %v136, 0
    %v257 = vsel %vm249, %v137, 0
    %v260 = vsel %vm249, %v138, 0
    %v263 = vsel %vm249, %v139, 0
    %v266 = vsel %vm249, %v140, 0
    %v269 = vsel %vm249, %v141, 0
    %v272 = vsel %vm249, %v142, 0
    %vm274 = vcmask 1040384
    %vm275 = vcmask 1041408
    %v276 = vsel %vm274, 4294967295, 65535
    %v277 = vsel %vm275, %v276, 0
    %v279 = vand.u32 %v149, %v277
    %v282 = vand.u32 %v150, %v277
    %v285 = vand.u32 %v151, %v277
    %v288 = vand.u32 %v152, %v277
    %290 = vmatprep.subr.bf16.mxu0 0
    %291 = vmatpush1.bf16.msra.mxu0 0
    %292 = vmatprep.subr.bf16.mxu0 0
    %293 = vmatpush1.bf16.msra.mxu0 0
    %294 = vmatprep.subr.bf16.mxu0 0
    %295 = vmatpush1.bf16.msra.mxu0 0
    %296 = vmatprep.subr.bf16.mxu0 0
    %297 = vmatpush1.bf16.msra.mxu0 0
    %298 = vmatprep.subr.bf16.mxu0 0
    %299 = vmatpush1.bf16.msra.mxu0 0
    %300 = vmatprep.subr.bf16.mxu0 0
    %301 = vmatpush1.bf16.msra.mxu0 0
    %302 = vmatprep.subr.bf16.mxu0 0
    %303 = vmatpush1.bf16.msra.mxu0 0
    %304 = vmatprep.subr.bf16.mxu0 %v282
    %305 = vmatpush1.bf16.msra.mxu0 %v279
    %306 = vmatprep.subr.bf16.mxu0 0
    %307 = vmatpush2.bf16.msra.mxu0 0
    %308 = vmatprep.subr.bf16.mxu0 0
    %309 = vmatpush2.bf16.msra.mxu0 0
    %310 = vmatprep.subr.bf16.mxu0 0
    %311 = vmatpush2.bf16.msra.mxu0 0
    %312 = vmatprep.subr.bf16.mxu0 0
    %313 = vmatpush2.bf16.msra.mxu0 0
    %314 = vmatprep.subr.bf16.mxu0 0
    %315 = vmatpush2.bf16.msra.mxu0 0
    %316 = vmatprep.subr.bf16.mxu0 0
    %317 = vmatpush2.bf16.msra.mxu0 0
    %318 = vmatprep.subr.bf16.mxu0 0
    %319 = vmatpush2.bf16.msra.mxu0 0
    %320 = vmatprep.subr.bf16.mxu0 0
    %321 = vmatpush2.bf16.msra.mxu0 0
    %322 = vmatprep.mubr.bf16.mxu0 0
    %323 = vmatmul.mubr.bf16.gmra.mxu0 %v251
    %v324 = vpop.f32.mrf.mxu0
    %v325 = vadd.f32 %v172, %v324
    %v326 = vpop.f32.mrf.mxu0
    %v327 = vadd.f32 %v172, %v326
    %v328 = vpop.f32.mrf.mxu0
    %v329 = vadd.f32 %v177, %v328
    %v330 = vpop.f32.mrf.mxu0
    %v331 = vadd.f32 %v177, %v330
    %332 = vmatprep.mubr.bf16.mxu0 0
    %333 = vmatmul.mubr.bf16.gmra.mxu0 %v254
    %v334 = vpop.f32.mrf.mxu0
    %v335 = vadd.f32 %v182, %v334
    %v336 = vpop.f32.mrf.mxu0
    %v337 = vadd.f32 %v182, %v336
    %v338 = vpop.f32.mrf.mxu0
    %v339 = vadd.f32 %v187, %v338
    %v340 = vpop.f32.mrf.mxu0
    %v341 = vadd.f32 %v187, %v340
    %342 = vmatprep.mubr.bf16.mxu0 0
    %343 = vmatmul.mubr.bf16.gmra.mxu0 %v257
    %v344 = vpop.f32.mrf.mxu0
    %v345 = vadd.f32 %v192, %v344
    %v346 = vpop.f32.mrf.mxu0
    %v347 = vadd.f32 %v192, %v346
    %v348 = vpop.f32.mrf.mxu0
    %v349 = vadd.f32 %v197, %v348
    %v350 = vpop.f32.mrf.mxu0
    %v351 = vadd.f32 %v197, %v350
    %352 = vmatprep.mubr.bf16.mxu0 0
    %353 = vmatmul.mubr.bf16.gmra.mxu0 %v260
    %v354 = vpop.f32.mrf.mxu0
    %v355 = vadd.f32 %v202, %v354
    %v356 = vpop.f32.mrf.mxu0
    %v357 = vadd.f32 %v202, %v356
    %v358 = vpop.f32.mrf.mxu0
    %v359 = vadd.f32 %v207, %v358
    %v360 = vpop.f32.mrf.mxu0
    %v361 = vadd.f32 %v207, %v360
    %362 = vmatprep.mubr.bf16.mxu0 0
    %363 = vmatmul.mubr.bf16.gmra.mxu0 %v263
    %v364 = vpop.f32.mrf.mxu0
    %v365 = vadd.f32 %v212, %v364
    %v366 = vpop.f32.mrf.mxu0
    %v367 = vadd.f32 %v212, %v366
    %v368 = vpop.f32.mrf.mxu0
    %v369 = vadd.f32 %v217, %v368
    %v370 = vpop.f32.mrf.mxu0
    %v371 = vadd.f32 %v217, %v370
    %372 = vmatprep.mubr.bf16.mxu0 0
    %373 = vmatmul.mubr.bf16.gmra.mxu0 %v266
    %v374 = vpop.f32.mrf.mxu0
    %v375 = vadd.f32 %v222, %v374
    %v376 = vpop.f32.mrf.mxu0
    %v377 = vadd.f32 %v222, %v376
    %v378 = vpop.f32.mrf.mxu0
    %v379 = vadd.f32 %v227, %v378
    %v380 = vpop.f32.mrf.mxu0
    %v381 = vadd.f32 %v227, %v380
    %382 = vmatprep.mubr.bf16.mxu0 0
    %383 = vmatmul.mubr.bf16.gmra.mxu0 %v269
    %v384 = vpop.f32.mrf.mxu0
    %v385 = vadd.f32 %v232, %v384
    %v386 = vpop.f32.mrf.mxu0
    %v387 = vadd.f32 %v232, %v386
    %v388 = vpop.f32.mrf.mxu0
    %v389 = vadd.f32 %v237, %v388
    %v390 = vpop.f32.mrf.mxu0
    %v391 = vadd.f32 %v237, %v390
    %392 = vmatprep.mubr.bf16.mxu0 0
    %393 = vmatmul.mubr.bf16.gmra.mxu0 %v272
    %v394 = vpop.f32.mrf.mxu0
    %v395 = vadd.f32 %v242, %v394
    %v396 = vpop.f32.mrf.mxu0
    %v397 = vadd.f32 %v242, %v396
    %v398 = vpop.f32.mrf.mxu0
    %v399 = vadd.f32 %v247, %v398
    %v400 = vpop.f32.mrf.mxu0
    %v401 = vadd.f32 %v247, %v400
    %402 = vdwg.mxu0
    %403 = vmatprep.subr.bf16.mxu0 0
    %404 = vmatpush1.bf16.msra.mxu0 0
    %405 = vmatprep.subr.bf16.mxu0 0
    %406 = vmatpush1.bf16.msra.mxu0 0
    %407 = vmatprep.subr.bf16.mxu0 0
    %408 = vmatpush1.bf16.msra.mxu0 0
    %409 = vmatprep.subr.bf16.mxu0 0
    %410 = vmatpush1.bf16.msra.mxu0 0
    %411 = vmatprep.subr.bf16.mxu0 0
    %412 = vmatpush1.bf16.msra.mxu0 0
    %413 = vmatprep.subr.bf16.mxu0 0
    %414 = vmatpush1.bf16.msra.mxu0 0
    %415 = vmatprep.subr.bf16.mxu0 0
    %416 = vmatpush1.bf16.msra.mxu0 0
    %417 = vmatprep.subr.bf16.mxu0 %v288
    %418 = vmatpush1.bf16.msra.mxu0 %v285
    %419 = vmatprep.subr.bf16.mxu0 0
    %420 = vmatpush2.bf16.msra.mxu0 0
    %421 = vmatprep.subr.bf16.mxu0 0
    %422 = vmatpush2.bf16.msra.mxu0 0
    %423 = vmatprep.subr.bf16.mxu0 0
    %424 = vmatpush2.bf16.msra.mxu0 0
    %425 = vmatprep.subr.bf16.mxu0 0
    %426 = vmatpush2.bf16.msra.mxu0 0
    %427 = vmatprep.subr.bf16.mxu0 0
    %428 = vmatpush2.bf16.msra.mxu0 0
    %429 = vmatprep.subr.bf16.mxu0 0
    %430 = vmatpush2.bf16.msra.mxu0 0
    %431 = vmatprep.subr.bf16.mxu0 0
    %432 = vmatpush2.bf16.msra.mxu0 0
    %433 = vmatprep.subr.bf16.mxu0 0
    %434 = vmatpush2.bf16.msra.mxu0 0
    %435 = vmatprep.mubr.bf16.mxu0 0
    %436 = vmatmul.mubr.bf16.gmra.mxu0 %v251
    %v437 = vpop.f32.mrf.mxu0
    %v438 = vadd.f32 %v172, %v437
    %v439 = vpop.f32.mrf.mxu0
    %v440 = vadd.f32 %v172, %v439
    %v441 = vpop.f32.mrf.mxu0
    %v442 = vadd.f32 %v177, %v441
    %v443 = vpop.f32.mrf.mxu0
    %v444 = vadd.f32 %v177, %v443
    %445 = vmatprep.mubr.bf16.mxu0 0
    %446 = vmatmul.mubr.bf16.gmra.mxu0 %v254
    %v447 = vpop.f32.mrf.mxu0
    %v448 = vadd.f32 %v182, %v447
    %v449 = vpop.f32.mrf.mxu0
    %v450 = vadd.f32 %v182, %v449
    %v451 = vpop.f32.mrf.mxu0
    %v452 = vadd.f32 %v187, %v451
    %v453 = vpop.f32.mrf.mxu0
    %v454 = vadd.f32 %v187, %v453
    %455 = vmatprep.mubr.bf16.mxu0 0
    %456 = vmatmul.mubr.bf16.gmra.mxu0 %v257
    %v457 = vpop.f32.mrf.mxu0
    %v458 = vadd.f32 %v192, %v457
    %v459 = vpop.f32.mrf.mxu0
    %v460 = vadd.f32 %v192, %v459
    %v461 = vpop.f32.mrf.mxu0
    %v462 = vadd.f32 %v197, %v461
    %v463 = vpop.f32.mrf.mxu0
    %v464 = vadd.f32 %v197, %v463
    %465 = vmatprep.mubr.bf16.mxu0 0
    %466 = vmatmul.mubr.bf16.gmra.mxu0 %v260
    %v467 = vpop.f32.mrf.mxu0
    %v468 = vadd.f32 %v202, %v467
    %v469 = vpop.f32.mrf.mxu0
    %v470 = vadd.f32 %v202, %v469
    %v471 = vpop.f32.mrf.mxu0
    %v472 = vadd.f32 %v207, %v471
    %v473 = vpop.f32.mrf.mxu0
    %v474 = vadd.f32 %v207, %v473
    %475 = vmatprep.mubr.bf16.mxu0 0
    %476 = vmatmul.mubr.bf16.gmra.mxu0 %v263
    %v477 = vpop.f32.mrf.mxu0
    %v478 = vadd.f32 %v212, %v477
    %v479 = vpop.f32.mrf.mxu0
    %v480 = vadd.f32 %v212, %v479
    %v481 = vpop.f32.mrf.mxu0
    %v482 = vadd.f32 %v217, %v481
    %v483 = vpop.f32.mrf.mxu0
    %v484 = vadd.f32 %v217, %v483
    %485 = vmatprep.mubr.bf16.mxu0 0
    %486 = vmatmul.mubr.bf16.gmra.mxu0 %v266
    %v487 = vpop.f32.mrf.mxu0
    %v488 = vadd.f32 %v222, %v487
    %v489 = vpop.f32.mrf.mxu0
    %v490 = vadd.f32 %v222, %v489
    %v491 = vpop.f32.mrf.mxu0
    %v492 = vadd.f32 %v227, %v491
    %v493 = vpop.f32.mrf.mxu0
    %v494 = vadd.f32 %v227, %v493
    %495 = vmatprep.mubr.bf16.mxu0 0
    %496 = vmatmul.mubr.bf16.gmra.mxu0 %v269
    %v497 = vpop.f32.mrf.mxu0
    %v498 = vadd.f32 %v232, %v497
    %v499 = vpop.f32.mrf.mxu0
    %v500 = vadd.f32 %v232, %v499
    %v501 = vpop.f32.mrf.mxu0
    %v502 = vadd.f32 %v237, %v501
    %v503 = vpop.f32.mrf.mxu0
    %v504 = vadd.f32 %v237, %v503
    %505 = vmatprep.mubr.bf16.mxu0 0
    %506 = vmatmul.mubr.bf16.gmra.mxu0 %v272
    %v507 = vpop.f32.mrf.mxu0
    %v508 = vadd.f32 %v242, %v507
    %v509 = vpop.f32.mrf.mxu0
    %v510 = vadd.f32 %v242, %v509
    %v511 = vpop.f32.mrf.mxu0
    %v512 = vadd.f32 %v247, %v511
    %v513 = vpop.f32.mrf.mxu0
    %v514 = vadd.f32 %v247, %v513
    %515 = vdwg.mxu0
    %v516 = vmul.f32 %v325, %v325
    %v517 = vmul.f32 %v327, %v327
    %v518 = vmul.f32 %v438, %v438
    %v519 = vmul.f32 %v440, %v440
    %v520 = vmul.f32 %v329, %v329
    %v521 = vmul.f32 %v331, %v331
    %v522 = vmul.f32 %v442, %v442
    %v523 = vmul.f32 %v444, %v444
    %v524 = vmul.f32 %v335, %v335
    %v525 = vmul.f32 %v337, %v337
    %v526 = vmul.f32 %v448, %v448
    %v527 = vmul.f32 %v450, %v450
    %v528 = vmul.f32 %v339, %v339
    %v529 = vmul.f32 %v341, %v341
    %v530 = vmul.f32 %v452, %v452
    %v531 = vmul.f32 %v454, %v454
    %v532 = vmul.f32 %v345, %v345
    %v533 = vmul.f32 %v347, %v347
    %v534 = vmul.f32 %v458, %v458
    %v535 = vmul.f32 %v460, %v460
    %v536 = vmul.f32 %v349, %v349
    %v537 = vmul.f32 %v351, %v351
    %v538 = vmul.f32 %v462, %v462
    %v539 = vmul.f32 %v464, %v464
    %v540 = vmul.f32 %v355, %v355
    %v541 = vmul.f32 %v357, %v357
    %v542 = vmul.f32 %v468, %v468
    %v543 = vmul.f32 %v470, %v470
    %v544 = vmul.f32 %v359, %v359
    %v545 = vmul.f32 %v361, %v361
    %v546 = vmul.f32 %v472, %v472
    %v547 = vmul.f32 %v474, %v474
    %v548 = vmul.f32 %v365, %v365
    %v549 = vmul.f32 %v367, %v367
    %v550 = vmul.f32 %v478, %v478
    %v551 = vmul.f32 %v480, %v480
    %v552 = vmul.f32 %v369, %v369
    %v553 = vmul.f32 %v371, %v371
    %v554 = vmul.f32 %v482, %v482
    %v555 = vmul.f32 %v484, %v484
    %v556 = vmul.f32 %v375, %v375
    %v557 = vmul.f32 %v377, %v377
    %v558 = vmul.f32 %v488, %v488
    %v559 = vmul.f32 %v490, %v490
    %v560 = vmul.f32 %v379, %v379
    %v561 = vmul.f32 %v381, %v381
    %v562 = vmul.f32 %v492, %v492
    %v563 = vmul.f32 %v494, %v494
    %v564 = vmul.f32 %v385, %v385
    %v565 = vmul.f32 %v387, %v387
    %v566 = vmul.f32 %v498, %v498
    %v567 = vmul.f32 %v500, %v500
    %v568 = vmul.f32 %v389, %v389
    %v569 = vmul.f32 %v391, %v391
    %v570 = vmul.f32 %v502, %v502
    %v571 = vmul.f32 %v504, %v504
    %v572 = vmul.f32 %v395, %v395
    %v573 = vmul.f32 %v397, %v397
    %v574 = vmul.f32 %v508, %v508
    %v575 = vmul.f32 %v510, %v510
    %v576 = vmul.f32 %v399, %v399
    %v577 = vmul.f32 %v401, %v401
    %v578 = vmul.f32 %v512, %v512
    %v579 = vmul.f32 %v514, %v514
    %v580 = vadd.f32 %v516, %v520
    %v581 = vadd.f32 %v580, %v524
    %v582 = vadd.f32 %v581, %v528
    %v583 = vadd.f32 %v582, %v532
    %v584 = vadd.f32 %v583, %v536
    %v585 = vadd.f32 %v584, %v540
    %v586 = vadd.f32 %v585, %v544
    %v587 = vadd.f32 %v586, %v548
    %v588 = vadd.f32 %v587, %v552
    %v589 = vadd.f32 %v588, %v556
    %v590 = vadd.f32 %v589, %v560
    %v591 = vadd.f32 %v590, %v564
    %v592 = vadd.f32 %v591, %v568
    %v593 = vadd.f32 %v592, %v572
    %v594 = vadd.f32 %v593, %v576
    %v595 = vrot.slane %v594, 4
    %v596 = vadd.f32 %v594, %v595
    %v597 = vrot.slane %v596, 2
    %v598 = vadd.f32 %v596, %v597
    %v599 = vrot.slane %v598, 1
    %v600 = vadd.f32 %v598, %v599
    %v601 = vadd.f32 %v517, %v521
    %v602 = vadd.f32 %v601, %v525
    %v603 = vadd.f32 %v602, %v529
    %v604 = vadd.f32 %v603, %v533
    %v605 = vadd.f32 %v604, %v537
    %v606 = vadd.f32 %v605, %v541
    %v607 = vadd.f32 %v606, %v545
    %v608 = vadd.f32 %v607, %v549
    %v609 = vadd.f32 %v608, %v553
    %v610 = vadd.f32 %v609, %v557
    %v611 = vadd.f32 %v610, %v561
    %v612 = vadd.f32 %v611, %v565
    %v613 = vadd.f32 %v612, %v569
    %v614 = vadd.f32 %v613, %v573
    %v615 = vadd.f32 %v614, %v577
    %v616 = vrot.slane %v615, 4
    %v617 = vadd.f32 %v615, %v616
    %v618 = vrot.slane %v617, 2
    %v619 = vadd.f32 %v617, %v618
    %v620 = vrot.slane %v619, 1
    %v621 = vadd.f32 %v619, %v620
    %v622 = vadd.f32 %v518, %v522
    %v623 = vadd.f32 %v622, %v526
    %v624 = vadd.f32 %v623, %v530
    %v625 = vadd.f32 %v624, %v534
    %v626 = vadd.f32 %v625, %v538
    %v627 = vadd.f32 %v626, %v542
    %v628 = vadd.f32 %v627, %v546
    %v629 = vadd.f32 %v628, %v550
    %v630 = vadd.f32 %v629, %v554
    %v631 = vadd.f32 %v630, %v558
    %v632 = vadd.f32 %v631, %v562
    %v633 = vadd.f32 %v632, %v566
    %v634 = vadd.f32 %v633, %v570
    %v635 = vadd.f32 %v634, %v574
    %v636 = vadd.f32 %v635, %v578
    %v637 = vrot.slane %v636, 4
    %v638 = vadd.f32 %v636, %v637
    %v639 = vrot.slane %v638, 2
    %v640 = vadd.f32 %v638, %v639
    %v641 = vrot.slane %v640, 1
    %v642 = vadd.f32 %v640, %v641
    %v643 = vadd.f32 %v519, %v523
    %v644 = vadd.f32 %v643, %v527
    %v645 = vadd.f32 %v644, %v531
    %v646 = vadd.f32 %v645, %v535
    %v647 = vadd.f32 %v646, %v539
    %v648 = vadd.f32 %v647, %v543
    %v649 = vadd.f32 %v648, %v547
    %v650 = vadd.f32 %v649, %v551
    %v651 = vadd.f32 %v650, %v555
    %v652 = vadd.f32 %v651, %v559
    %v653 = vadd.f32 %v652, %v563
    %v654 = vadd.f32 %v653, %v567
    %v655 = vadd.f32 %v654, %v571
    %v656 = vadd.f32 %v655, %v575
    %v657 = vadd.f32 %v656, %v579
    %v658 = vrot.slane %v657, 4
    %v659 = vadd.f32 %v657, %v658
    %v660 = vrot.slane %v659, 2
    %v661 = vadd.f32 %v659, %v660
    %v662 = vrot.slane %v661, 1
    %v663 = vadd.f32 %v661, %v662
    %v664 = vadd.f32 %v600, 1e-12
    %v665 = vadd.f32 %v621, 1e-12
    %v666 = vadd.f32 %v642, 1e-12
    %v667 = vadd.f32 %v663, 1e-12
    %v668 = vrsqrt.pop %v664
    %v669 = vrsqrt.pop %v665
    %v670 = vrsqrt.pop %v666
    %v671 = vrsqrt.pop %v667
    %v672 = vmul.f32 %v325, %v668
    %v673 = vmul.f32 %v327, %v669
    %v674 = vmul.f32 %v438, %v670
    %v675 = vmul.f32 %v440, %v671
    %v676 = vmul.f32 %v329, %v668
    %v677 = vmul.f32 %v331, %v669
    %v678 = vmul.f32 %v442, %v670
    %v679 = vmul.f32 %v444, %v671
    %v680 = vmul.f32 %v335, %v668
    %v681 = vmul.f32 %v337, %v669
    %v682 = vmul.f32 %v448, %v670
    %v683 = vmul.f32 %v450, %v671
    %v684 = vmul.f32 %v339, %v668
    %v685 = vmul.f32 %v341, %v669
    %v686 = vmul.f32 %v452, %v670
    %v687 = vmul.f32 %v454, %v671
    %v688 = vmul.f32 %v345, %v668
    %v689 = vmul.f32 %v347, %v669
    %v690 = vmul.f32 %v458, %v670
    %v691 = vmul.f32 %v460, %v671
    %v692 = vmul.f32 %v349, %v668
    %v693 = vmul.f32 %v351, %v669
    %v694 = vmul.f32 %v462, %v670
    %v695 = vmul.f32 %v464, %v671
    %v696 = vmul.f32 %v355, %v668
    %v697 = vmul.f32 %v357, %v669
    %v698 = vmul.f32 %v468, %v670
    %v699 = vmul.f32 %v470, %v671
    %v700 = vmul.f32 %v359, %v668
    %v701 = vmul.f32 %v361, %v669
    %v702 = vmul.f32 %v472, %v670
    %v703 = vmul.f32 %v474, %v671
    %v704 = vmul.f32 %v365, %v668
    %v705 = vmul.f32 %v367, %v669
    %v706 = vmul.f32 %v478, %v670
    %v707 = vmul.f32 %v480, %v671
    %v708 = vmul.f32 %v369, %v668
    %v709 = vmul.f32 %v371, %v669
    %v710 = vmul.f32 %v482, %v670
    %v711 = vmul.f32 %v484, %v671
    %v712 = vmul.f32 %v375, %v668
    %v713 = vmul.f32 %v377, %v669
    %v714 = vmul.f32 %v488, %v670
    %v715 = vmul.f32 %v490, %v671
    %v716 = vmul.f32 %v379, %v668
    %v717 = vmul.f32 %v381, %v669
    %v718 = vmul.f32 %v492, %v670
    %v719 = vmul.f32 %v494, %v671
    %v720 = vmul.f32 %v385, %v668
    %v721 = vmul.f32 %v387, %v669
    %v722 = vmul.f32 %v498, %v670
    %v723 = vmul.f32 %v500, %v671
    %v724 = vmul.f32 %v389, %v668
    %v725 = vmul.f32 %v391, %v669
    %v726 = vmul.f32 %v502, %v670
    %v727 = vmul.f32 %v504, %v671
    %v728 = vmul.f32 %v395, %v668
    %v729 = vmul.f32 %v397, %v669
    %v730 = vmul.f32 %v508, %v670
    %v731 = vmul.f32 %v510, %v671
    %v732 = vmul.f32 %v399, %v668
    %v733 = vmul.f32 %v401, %v669
    %v734 = vmul.f32 %v512, %v670
    %v735 = vmul.f32 %v514, %v671
    %736 = vxpose.xlu0.b32.start [1/16] %v672, 128
    %737 = vxpose.xlu0.b32.cont [2/16] %v676, 128
    %738 = vxpose.xlu0.b32.cont [3/16] %v680, 128
    %739 = vxpose.xlu0.b32.cont [4/16] %v684, 128
    %740 = vxpose.xlu0.b32.cont [5/16] %v688, 128
    %741 = vxpose.xlu0.b32.cont [6/16] %v692, 128
    %742 = vxpose.xlu0.b32.cont [7/16] %v696, 128
    %743 = vxpose.xlu0.b32.cont [8/16] %v700, 128
    %744 = vxpose.xlu0.b32.cont [9/16] %v704, 128
    %745 = vxpose.xlu0.b32.cont [10/16] %v708, 128
    %746 = vxpose.xlu0.b32.cont [11/16] %v712, 128
    %747 = vxpose.xlu0.b32.cont [12/16] %v716, 128
    %748 = vxpose.xlu0.b32.cont [13/16] %v720, 128
    %749 = vxpose.xlu0.b32.cont [14/16] %v724, 128
    %750 = vxpose.xlu0.b32.cont [15/16] %v728, 128
    %751 = vxpose.xlu0.b32.end [16/16] %v732, 128
    %v752 = vpop.trf.xlu0
    %v753 = vpop.trf.xlu0
    %v754 = vpop.trf.xlu0
    %v755 = vpop.trf.xlu0
    %v756 = vpop.trf.xlu0
    %v757 = vpop.trf.xlu0
    %v758 = vpop.trf.xlu0
    %v759 = vpop.trf.xlu0
    %v760 = vpop.trf.xlu0
    %v761 = vpop.trf.xlu0
    %v762 = vpop.trf.xlu0
    %v763 = vpop.trf.xlu0
    %v764 = vpop.trf.xlu0
    %v765 = vpop.trf.xlu0
    %v766 = vpop.trf.xlu0
    %v767 = vpop.trf.xlu0
    %768 = vxpose.xlu0.b32.start [1/16] %v673, 128
    %769 = vxpose.xlu0.b32.cont [2/16] %v677, 128
    %770 = vxpose.xlu0.b32.cont [3/16] %v681, 128
    %771 = vxpose.xlu0.b32.cont [4/16] %v685, 128
    %772 = vxpose.xlu0.b32.cont [5/16] %v689, 128
    %773 = vxpose.xlu0.b32.cont [6/16] %v693, 128
    %774 = vxpose.xlu0.b32.cont [7/16] %v697, 128
    %775 = vxpose.xlu0.b32.cont [8/16] %v701, 128
    %776 = vxpose.xlu0.b32.cont [9/16] %v705, 128
    %777 = vxpose.xlu0.b32.cont [10/16] %v709, 128
    %778 = vxpose.xlu0.b32.cont [11/16] %v713, 128
    %779 = vxpose.xlu0.b32.cont [12/16] %v717, 128
    %780 = vxpose.xlu0.b32.cont [13/16] %v721, 128
    %781 = vxpose.xlu0.b32.cont [14/16] %v725, 128
    %782 = vxpose.xlu0.b32.cont [15/16] %v729, 128
    %783 = vxpose.xlu0.b32.end [16/16] %v733, 128
    %v784 = vpop.trf.xlu0
    %v785 = vpop.trf.xlu0
    %v786 = vpop.trf.xlu0
    %v787 = vpop.trf.xlu0
    %v788 = vpop.trf.xlu0
    %v789 = vpop.trf.xlu0
    %v790 = vpop.trf.xlu0
    %v791 = vpop.trf.xlu0
    %v792 = vpop.trf.xlu0
    %v793 = vpop.trf.xlu0
    %v794 = vpop.trf.xlu0
    %v795 = vpop.trf.xlu0
    %v796 = vpop.trf.xlu0
    %v797 = vpop.trf.xlu0
    %v798 = vpop.trf.xlu0
    %v799 = vpop.trf.xlu0
    %800 = vxpose.xlu0.b32.start [1/16] %v674, 128
    %801 = vxpose.xlu0.b32.cont [2/16] %v678, 128
    %802 = vxpose.xlu0.b32.cont [3/16] %v682, 128
    %803 = vxpose.xlu0.b32.cont [4/16] %v686, 128
    %804 = vxpose.xlu0.b32.cont [5/16] %v690, 128
    %805 = vxpose.xlu0.b32.cont [6/16] %v694, 128
    %806 = vxpose.xlu0.b32.cont [7/16] %v698, 128
    %807 = vxpose.xlu0.b32.cont [8/16] %v702, 128
    %808 = vxpose.xlu0.b32.cont [9/16] %v706, 128
    %809 = vxpose.xlu0.b32.cont [10/16] %v710, 128
    %810 = vxpose.xlu0.b32.cont [11/16] %v714, 128
    %811 = vxpose.xlu0.b32.cont [12/16] %v718, 128
    %812 = vxpose.xlu0.b32.cont [13/16] %v722, 128
    %813 = vxpose.xlu0.b32.cont [14/16] %v726, 128
    %814 = vxpose.xlu0.b32.cont [15/16] %v730, 128
    %815 = vxpose.xlu0.b32.end [16/16] %v734, 128
    %v816 = vpop.trf.xlu0
    %v817 = vpop.trf.xlu0
    %v818 = vpop.trf.xlu0
    %v819 = vpop.trf.xlu0
    %v820 = vpop.trf.xlu0
    %v821 = vpop.trf.xlu0
    %v822 = vpop.trf.xlu0
    %v823 = vpop.trf.xlu0
    %v824 = vpop.trf.xlu0
    %v825 = vpop.trf.xlu0
    %v826 = vpop.trf.xlu0
    %v827 = vpop.trf.xlu0
    %v828 = vpop.trf.xlu0
    %v829 = vpop.trf.xlu0
    %v830 = vpop.trf.xlu0
    %v831 = vpop.trf.xlu0
    %832 = vxpose.xlu0.b32.start [1/16] %v675, 128
    %833 = vxpose.xlu0.b32.cont [2/16] %v679, 128
    %834 = vxpose.xlu0.b32.cont [3/16] %v683, 128
    %835 = vxpose.xlu0.b32.cont [4/16] %v687, 128
    %836 = vxpose.xlu0.b32.cont [5/16] %v691, 128
    %837 = vxpose.xlu0.b32.cont [6/16] %v695, 128
    %838 = vxpose.xlu0.b32.cont [7/16] %v699, 128
    %839 = vxpose.xlu0.b32.cont [8/16] %v703, 128
    %840 = vxpose.xlu0.b32.cont [9/16] %v707, 128
    %841 = vxpose.xlu0.b32.cont [10/16] %v711, 128
    %842 = vxpose.xlu0.b32.cont [11/16] %v715, 128
    %843 = vxpose.xlu0.b32.cont [12/16] %v719, 128
    %844 = vxpose.xlu0.b32.cont [13/16] %v723, 128
    %845 = vxpose.xlu0.b32.cont [14/16] %v727, 128
    %846 = vxpose.xlu0.b32.cont [15/16] %v731, 128
    %847 = vxpose.xlu0.b32.end [16/16] %v735, 128
    %v848 = vpop.trf.xlu0
    %v849 = vpop.trf.xlu0
    %v850 = vpop.trf.xlu0
    %v851 = vpop.trf.xlu0
    %v852 = vpop.trf.xlu0
    %v853 = vpop.trf.xlu0
    %v854 = vpop.trf.xlu0
    %v855 = vpop.trf.xlu0
    %v856 = vpop.trf.xlu0
    %v857 = vpop.trf.xlu0
    %v858 = vpop.trf.xlu0
    %v859 = vpop.trf.xlu0
    %v860 = vpop.trf.xlu0
    %v861 = vpop.trf.xlu0
    %v862 = vpop.trf.xlu0
    %v863 = vpop.trf.xlu0
    %v864 = vpack.c.bf16 %v753, %v752
    %v865 = vpack.c.bf16 %v755, %v754
    %v866 = vpack.c.bf16 %v757, %v756
    %v867 = vpack.c.bf16 %v759, %v758
    %v868 = vpack.c.bf16 %v761, %v760
    %v869 = vpack.c.bf16 %v763, %v762
    %v870 = vpack.c.bf16 %v765, %v764
    %v871 = vpack.c.bf16 %v767, %v766
    %v872 = vpack.c.bf16 %v785, %v784
    %v873 = vpack.c.bf16 %v787, %v786
    %v874 = vpack.c.bf16 %v789, %v788
    %v875 = vpack.c.bf16 %v791, %v790
    %v876 = vpack.c.bf16 %v793, %v792
    %v877 = vpack.c.bf16 %v795, %v794
    %v878 = vpack.c.bf16 %v797, %v796
    %v879 = vpack.c.bf16 %v799, %v798
    %v880 = vpack.c.bf16 %v817, %v816
    %v881 = vpack.c.bf16 %v819, %v818
    %v882 = vpack.c.bf16 %v821, %v820
    %v883 = vpack.c.bf16 %v823, %v822
    %v884 = vpack.c.bf16 %v825, %v824
    %v885 = vpack.c.bf16 %v827, %v826
    %v886 = vpack.c.bf16 %v829, %v828
    %v887 = vpack.c.bf16 %v831, %v830
    %v888 = vpack.c.bf16 %v849, %v848
    %v889 = vpack.c.bf16 %v851, %v850
    %v890 = vpack.c.bf16 %v853, %v852
    %v891 = vpack.c.bf16 %v855, %v854
    %v892 = vpack.c.bf16 %v857, %v856
    %v893 = vpack.c.bf16 %v859, %v858
    %v894 = vpack.c.bf16 %v861, %v860
    %v895 = vpack.c.bf16 %v863, %v862
    %v928 = vunpack.c.l.b16 %v864
    %v929 = vunpack.c.h.b16 %v864
    %v930 = vunpack.c.l.b16 %v865
    %v931 = vunpack.c.h.b16 %v865
    %v932 = vunpack.c.l.b16 %v866
    %v933 = vunpack.c.h.b16 %v866
    %v934 = vunpack.c.l.b16 %v867
    %v935 = vunpack.c.h.b16 %v867
    %v936 = vunpack.c.l.b16 %v868
    %v937 = vunpack.c.h.b16 %v868
    %v938 = vunpack.c.l.b16 %v869
    %v939 = vunpack.c.h.b16 %v869
    %v940 = vunpack.c.l.b16 %v870
    %v941 = vunpack.c.h.b16 %v870
    %v942 = vunpack.c.l.b16 %v871
    %v943 = vunpack.c.h.b16 %v871
    %v944 = vunpack.c.l.b16 %v872
    %v945 = vunpack.c.h.b16 %v872
    %v946 = vunpack.c.l.b16 %v873
    %v947 = vunpack.c.h.b16 %v873
    %v948 = vunpack.c.l.b16 %v874
    %v949 = vunpack.c.h.b16 %v874
    %v950 = vunpack.c.l.b16 %v875
    %v951 = vunpack.c.h.b16 %v875
    %v952 = vunpack.c.l.b16 %v876
    %v953 = vunpack.c.h.b16 %v876
    %v954 = vunpack.c.l.b16 %v877
    %v955 = vunpack.c.h.b16 %v877
    %v956 = vunpack.c.l.b16 %v878
    %v957 = vunpack.c.h.b16 %v878
    %v958 = vunpack.c.l.b16 %v879
    %v959 = vunpack.c.h.b16 %v879
    %v960 = vunpack.c.l.b16 %v880
    %v961 = vunpack.c.h.b16 %v880
    %v962 = vunpack.c.l.b16 %v881
    %v963 = vunpack.c.h.b16 %v881
    %v964 = vunpack.c.l.b16 %v882
    %v965 = vunpack.c.h.b16 %v882
    %v966 = vunpack.c.l.b16 %v883
    %v967 = vunpack.c.h.b16 %v883
    %v968 = vunpack.c.l.b16 %v884
    %v969 = vunpack.c.h.b16 %v884
    %v970 = vunpack.c.l.b16 %v885
    %v971 = vunpack.c.h.b16 %v885
    %v972 = vunpack.c.l.b16 %v886
    %v973 = vunpack.c.h.b16 %v886
    %v974 = vunpack.c.l.b16 %v887
    %v975 = vunpack.c.h.b16 %v887
    %v976 = vunpack.c.l.b16 %v888
    %v977 = vunpack.c.h.b16 %v888
    %v978 = vunpack.c.l.b16 %v889
    %v979 = vunpack.c.h.b16 %v889
    %v980 = vunpack.c.l.b16 %v890
    %v981 = vunpack.c.h.b16 %v890
    %v982 = vunpack.c.l.b16 %v891
    %v983 = vunpack.c.h.b16 %v891
    %v984 = vunpack.c.l.b16 %v892
    %v985 = vunpack.c.h.b16 %v892
    %v986 = vunpack.c.l.b16 %v893
    %v987 = vunpack.c.h.b16 %v893
    %v988 = vunpack.c.l.b16 %v894
    %v989 = vunpack.c.h.b16 %v894
    %v990 = vunpack.c.l.b16 %v895
    %v991 = vunpack.c.h.b16 %v895
    %v992 = vpack.c.b16 %v928, %v928
    %v993 = vpack.c.b16 %v929, %v929
    %v994 = vpack.c.b16 %v930, %v930
    %v995 = vpack.c.b16 %v931, %v931
    %v996 = vpack.c.b16 %v932, %v932
    %v997 = vpack.c.b16 %v933, %v933
    %v998 = vpack.c.b16 %v934, %v934
    %v999 = vpack.c.b16 %v935, %v935
    %v1000 = vpack.c.b16 %v936, %v936
    %v1001 = vpack.c.b16 %v937, %v937
    %v1002 = vpack.c.b16 %v938, %v938
    %v1003 = vpack.c.b16 %v939, %v939
    %v1004 = vpack.c.b16 %v940, %v940
    %v1005 = vpack.c.b16 %v941, %v941
    %v1006 = vpack.c.b16 %v942, %v942
    %v1007 = vpack.c.b16 %v943, %v943
    %v1008 = vpack.c.b16 %v944, %v944
    %v1009 = vpack.c.b16 %v945, %v945
    %v1010 = vpack.c.b16 %v946, %v946
    %v1011 = vpack.c.b16 %v947, %v947
    %v1012 = vpack.c.b16 %v948, %v948
    %v1013 = vpack.c.b16 %v949, %v949
    %v1014 = vpack.c.b16 %v950, %v950
    %v1015 = vpack.c.b16 %v951, %v951
    %v1016 = vpack.c.b16 %v952, %v952
    %v1017 = vpack.c.b16 %v953, %v953
    %v1018 = vpack.c.b16 %v954, %v954
    %v1019 = vpack.c.b16 %v955, %v955
    %v1020 = vpack.c.b16 %v956, %v956
    %v1021 = vpack.c.b16 %v957, %v957
    %v1022 = vpack.c.b16 %v958, %v958
    %v1023 = vpack.c.b16 %v959, %v959
    %v1024 = vpack.c.b16 %v960, %v960
    %v1025 = vpack.c.b16 %v961, %v961
    %v1026 = vpack.c.b16 %v962, %v962
    %v1027 = vpack.c.b16 %v963, %v963
    %v1028 = vpack.c.b16 %v964, %v964
    %v1029 = vpack.c.b16 %v965, %v965
    %v1030 = vpack.c.b16 %v966, %v966
    %v1031 = vpack.c.b16 %v967, %v967
    %v1032 = vpack.c.b16 %v968, %v968
    %v1033 = vpack.c.b16 %v969, %v969
    %v1034 = vpack.c.b16 %v970, %v970
    %v1035 = vpack.c.b16 %v971, %v971
    %v1036 = vpack.c.b16 %v972, %v972
    %v1037 = vpack.c.b16 %v973, %v973
    %v1038 = vpack.c.b16 %v974, %v974
    %v1039 = vpack.c.b16 %v975, %v975
    %v1040 = vpack.c.b16 %v976, %v976
    %v1041 = vpack.c.b16 %v977, %v977
    %v1042 = vpack.c.b16 %v978, %v978
    %v1043 = vpack.c.b16 %v979, %v979
    %v1044 = vpack.c.b16 %v980, %v980
    %v1045 = vpack.c.b16 %v981, %v981
    %v1046 = vpack.c.b16 %v982, %v982
    %v1047 = vpack.c.b16 %v983, %v983
    %v1048 = vpack.c.b16 %v984, %v984
    %v1049 = vpack.c.b16 %v985, %v985
    %v1050 = vpack.c.b16 %v986, %v986
    %v1051 = vpack.c.b16 %v987, %v987
    %v1052 = vpack.c.b16 %v988, %v988
    %v1053 = vpack.c.b16 %v989, %v989
    %v1054 = vpack.c.b16 %v990, %v990
    %v1055 = vpack.c.b16 %v991, %v991
    %1120 = vst [vmem:[#allocation7] sm:$0xf] %v992
    %1121 = vst [vmem:[#allocation7 + $0x4] sm:$0xf] %v993
    %1122 = vst [vmem:[#allocation7 + $0x8] sm:$0xf] %v994
    %1123 = vst [vmem:[#allocation7 + $0xc] sm:$0xf] %v995
    %1124 = vst [vmem:[#allocation7 + $0x10] sm:$0xf] %v996
    %1125 = vst [vmem:[#allocation7 + $0x14] sm:$0xf] %v997
    %1126 = vst [vmem:[#allocation7 + $0x18] sm:$0xf] %v998
    %1127 = vst [vmem:[#allocation7 + $0x1c] sm:$0xf] %v999
    %1128 = vst [vmem:[#allocation7 + $0x20] sm:$0xf] %v1000
    %1129 = vst [vmem:[#allocation7 + $0x24] sm:$0xf] %v1001
    %1130 = vst [vmem:[#allocation7 + $0x28] sm:$0xf] %v1002
    %1131 = vst [vmem:[#allocation7 + $0x2c] sm:$0xf] %v1003
    %1132 = vst [vmem:[#allocation7 + $0x30] sm:$0xf] %v1004
    %1133 = vst [vmem:[#allocation7 + $0x34] sm:$0xf] %v1005
    %1134 = vst [vmem:[#allocation7 + $0x38] sm:$0xf] %v1006
    %1135 = vst [vmem:[#allocation7 + $0x3c] sm:$0xf] %v1007
    %1136 = vst [vmem:[#allocation7 + $0x40] sm:$0xf] %v1008
    %1137 = vst [vmem:[#allocation7 + $0x44] sm:$0xf] %v1009
    %1138 = vst [vmem:[#allocation7 + $0x48] sm:$0xf] %v1010
    %1139 = vst [vmem:[#allocation7 + $0x4c] sm:$0xf] %v1011
    %1140 = vst [vmem:[#allocation7 + $0x50] sm:$0xf] %v1012
    %1141 = vst [vmem:[#allocation7 + $0x54] sm:$0xf] %v1013
    %1142 = vst [vmem:[#allocation7 + $0x58] sm:$0xf] %v1014
    %1143 = vst [vmem:[#allocation7 + $0x5c] sm:$0xf] %v1015
    %1144 = vst [vmem:[#allocation7 + $0x60] sm:$0xf] %v1016
    %1145 = vst [vmem:[#allocation7 + $0x64] sm:$0xf] %v1017
    %1146 = vst [vmem:[#allocation7 + $0x68] sm:$0xf] %v1018
    %1147 = vst [vmem:[#allocation7 + $0x6c] sm:$0xf] %v1019
    %1148 = vst [vmem:[#allocation7 + $0x70] sm:$0xf] %v1020
    %1149 = vst [vmem:[#allocation7 + $0x74] sm:$0xf] %v1021
    %1150 = vst [vmem:[#allocation7 + $0x78] sm:$0xf] %v1022
    %1151 = vst [vmem:[#allocation7 + $0x7c] sm:$0xf] %v1023
    %1152 = vst [vmem:[#allocation7 + $0x80] sm:$0xf] %v1024
    %1153 = vst [vmem:[#allocation7 + $0x84] sm:$0xf] %v1025
    %1154 = vst [vmem:[#allocation7 + $0x88] sm:$0xf] %v1026
    %1155 = vst [vmem:[#allocation7 + $0x8c] sm:$0xf] %v1027
    %1156 = vst [vmem:[#allocation7 + $0x90] sm:$0xf] %v1028
    %1157 = vst [vmem:[#allocation7 + $0x94] sm:$0xf] %v1029
    %1158 = vst [vmem:[#allocation7 + $0x98] sm:$0xf] %v1030
    %1159 = vst [vmem:[#allocation7 + $0x9c] sm:$0xf] %v1031
    %1160 = vst [vmem:[#allocation7 + $0xa0] sm:$0xf] %v1032
    %1161 = vst [vmem:[#allocation7 + $0xa4] sm:$0xf] %v1033
    %1162 = vst [vmem:[#allocation7 + $0xa8] sm:$0xf] %v1034
    %1163 = vst [vmem:[#allocation7 + $0xac] sm:$0xf] %v1035
    %1164 = vst [vmem:[#allocation7 + $0xb0] sm:$0xf] %v1036
    %1165 = vst [vmem:[#allocation7 + $0xb4] sm:$0xf] %v1037
    %1166 = vst [vmem:[#allocation7 + $0xb8] sm:$0xf] %v1038
    %1167 = vst [vmem:[#allocation7 + $0xbc] sm:$0xf] %v1039
    %1168 = vst [vmem:[#allocation7 + $0xc0] sm:$0xf] %v1040
    %1169 = vst [vmem:[#allocation7 + $0xc4] sm:$0xf] %v1041
    %1170 = vst [vmem:[#allocation7 + $0xc8] sm:$0xf] %v1042
    %1171 = vst [vmem:[#allocation7 + $0xcc] sm:$0xf] %v1043
    %1172 = vst [vmem:[#allocation7 + $0xd0] sm:$0xf] %v1044
    %1173 = vst [vmem:[#allocation7 + $0xd4] sm:$0xf] %v1045
    %1174 = vst [vmem:[#allocation7 + $0xd8] sm:$0xf] %v1046
    %1175 = vst [vmem:[#allocation7 + $0xdc] sm:$0xf] %v1047
    %1176 = vst [vmem:[#allocation7 + $0xe0] sm:$0xf] %v1048
    %1177 = vst [vmem:[#allocation7 + $0xe4] sm:$0xf] %v1049
    %1178 = vst [vmem:[#allocation7 + $0xe8] sm:$0xf] %v1050
    %1179 = vst [vmem:[#allocation7 + $0xec] sm:$0xf] %v1051
    %1180 = vst [vmem:[#allocation7 + $0xf0] sm:$0xf] %v1052
    %1181 = vst [vmem:[#allocation7 + $0xf4] sm:$0xf] %v1053
    %1182 = vst [vmem:[#allocation7 + $0xf8] sm:$0xf] %v1054
    %1183 = vst [vmem:[#allocation7 + $0xfc] sm:$0xf] %v1055
    // Predicated region
    $region26: #{tpu_custom_call.1} parent=1 // pred_check
      _
    $region27: #{tpu_custom_call.1} parent=1 // pred_check_branch
      %1185 = sbr.rel (0) target = $region29
    $region28: #{tpu_custom_call.1} parent=1 // pred_region
      %s1187 = ssub.s32 64, 64
      %1188 = vsyncadd [#allocation4], %s1187
      %s1190 = sshll.u32 [#allocation6], 4
      %s1191 = int_to_ptr.vmem [resolvable:$true] %s1190
      %1193 = dma.vmem_to_hbm [thread:$0]  %s1191, 64, %s5, [#allocation4]
    $region29: #{tpu_custom_call.1} parent=1 // pred_fallthru
      _
    // Predicated region
    $region30: #{tpu_custom_call.1} parent=1 // pred_check
      _
    $region31: #{tpu_custom_call.1} parent=1 // pred_check_branch
      %1195 = sbr.rel (0) target = $region33
    $region32: #{tpu_custom_call.1} parent=1 // pred_region
      %s1197 = ssub.s32 4096, 4096
      %1198 = vsyncadd [#allocation8], %s1197
      %s1199 = sshll.u32 [#allocation7], 4
      %s1200 = int_to_ptr.vmem [resolvable:$true] %s1199
      %1205 = dma.vmem_to_hbm [thread:$0]  %s1200, 4096, %s6, [#allocation8], 64, 64, 4
    $region33: #{tpu_custom_call.1} parent=1 // pred_fallthru
      _
    // Predicated region
    $region34: #{tpu_custom_call.1} parent=1 // pred_check
      _
    $region35: #{tpu_custom_call.1} parent=1 // pred_check_branch
      %1207 = sbr.rel (0) target = $region37
    $region36: #{tpu_custom_call.1} parent=1 // pred_region
      %1208 = dma.done [#allocation4], 64
    $region37: #{tpu_custom_call.1} parent=1 // pred_fallthru
      _
    // Predicated region
    $region38: #{tpu_custom_call.1} parent=1 // pred_check
      _
    $region39: #{tpu_custom_call.1} parent=1 // pred_check_branch
      %1210 = sbr.rel (0) target = $region41
    $region40: #{tpu_custom_call.1} parent=1 // pred_region
      %1211 = dma.done [#allocation8], 4096
    $region41: #{tpu_custom_call.1} parent=1 // pred_fallthru
      _
    %1212 = vsyncpa [#allocation4], 1
    %1213 = vsyncpa [#allocation8], 1
    %1214 = vsyncpa [#allocation5], 1

</llo_original>
